<compile_context>
chip_gen: v7x
topology: tpu7x:2x2x1
jax: 0.10.0
libtpu: 0.0.40
codegen_flags: <defaults>
</compile_context>

<pallas_src>
import numpy as np
import jax
import jax.numpy as jnp
from jax.experimental import pallas as pl
from jax.experimental.pallas import tpu as pltpu

LANE = 128  # vreg lane width; concat offsets are expressed in (rows, 128) tiles


def _make_concat_dma_kernel(row_counts):
    """Kernel: one HBM->HBM DMA per parameter into its row-slice of the output."""
    offs = np.concatenate([[0], np.cumsum(row_counts)]).astype(int)
    n_params = len(row_counts)

    def kernel(*refs):
        # refs = (*param_hbm_refs, out_hbm_ref, dma_sems)
        param_refs = refs[:n_params]
        out_ref = refs[n_params]
        sems = refs[n_params + 1]

        copies = []
        for p, pref in enumerate(param_refs):
            lo = int(offs[p])
            rc = int(row_counts[p])
            cp = pltpu.make_async_copy(
                pref,                          # whole parameter tile in HBM
                out_ref.at[pl.ds(lo, rc), :],  # its row-slice of the flat buffer
                sems.at[p],
            )
            cp.start()
            copies.append(cp)
        # All DMAs are in flight and overlap in the DMA engine; now drain them.
        for cp in copies:
            cp.wait()

    return kernel


def get_flat_weights(params):
    """Pallas equivalent of Model.get_flat_weights(): concat of flattened params."""
    sizes = [int(np.prod(p.shape)) for p in params]
    total = int(sum(sizes))
    if total == 0:
        return jnp.zeros((0,), jnp.float32)

    if any(n % LANE != 0 for n in sizes):
        # TODO(synk): non-lane-aligned parameter sizes (odd biases, norm scales)
        # use the XLA concat fallback; a padded-tail DMA path could cover them.
        return jnp.concatenate(
            [jnp.asarray(p, jnp.float32).reshape(-1) for p in params]
        )

    row_counts = [n // LANE for n in sizes]
    r_total = total // LANE

    # Cast only when needed (no extra HBM materialization for f32 params),
    # and view each parameter as a lane-major (rows, 128) tile.
    reshaped = [
        (p if p.dtype == jnp.float32 else p.astype(jnp.float32)).reshape(rc, LANE)
        for p, rc in zip(params, row_counts)
    ]

    kernel = _make_concat_dma_kernel(row_counts)

    flat2d = pl.pallas_call(
        kernel,
        in_specs=[pl.BlockSpec(memory_space=pl.ANY)] * len(params),  # raw HBM refs
        out_specs=pl.BlockSpec(memory_space=pl.ANY),                 # raw HBM ref
        out_shape=jax.ShapeDtypeStruct((r_total, LANE), jnp.float32),
        scratch_shapes=[pltpu.SemaphoreType.DMA((len(params),))],
    )(*reshaped)
    return flat2d.reshape(-1)


def load_flat_weights(flat, shapes):
    """Plain-JAX equivalent of Model.load_flat_weights() (slice + reshape glue).

    Matches the torch reference: restored parameters are float32.
    """
    out, i = [], 0
    for s in shapes:
        n = int(np.prod(s))
        out.append(flat[i:i + n].reshape(s).astype(jnp.float32))
        i += n
    return out


if __name__ == "__main__":
    # Deterministic synthetic parameters (the base class declares none; shapes
    # are small and lane-aligned so the DMA kernel path is exercised).
    key = jax.random.PRNGKey(0)
    k1, k2, k3, k4 = jax.random.split(key, 4)
    params = [
        jax.random.normal(k1, (32, 32), dtype=jnp.float32),   # "weight1" -> 8 rows
        jax.random.normal(k2, (128,), dtype=jnp.float32),      # "bias1"   -> 1 row
        jax.random.normal(k3, (16, 16), dtype=jnp.float32),    # "weight2" -> 2 rows
        jax.random.normal(k4, (256,), dtype=jnp.float32),      # "bias2"   -> 2 rows
    ]
    shapes = [p.shape for p in params]

    # Kernel: flatten + concat all parameters via direct HBM->HBM DMAs.
    flat = jax.block_until_ready(get_flat_weights(params))

    # Reference check against plain-JAX concat (== torch.cat of flattened params).
    ref = jnp.concatenate([p.reshape(-1) for p in params])
    assert flat.shape == ref.shape and flat.dtype == jnp.float32
    np.testing.assert_allclose(np.asarray(flat), np.asarray(ref), rtol=0, atol=0)

    # Round-trip through load_flat_weights.
    restored = load_flat_weights(flat, shapes)
    for orig, rec in zip(params, restored):
        np.testing.assert_allclose(np.asarray(rec), np.asarray(orig), rtol=0, atol=0)

    # Non-lane-aligned parameter sizes take the fallback path (correctness only).
    odd_params = [
        jax.random.normal(k1, (5, 7), dtype=jnp.float32),
        jax.random.normal(k2, (33,), dtype=jnp.float32),
    ]
    flat_odd = jax.block_until_ready(get_flat_weights(odd_params))
    ref_odd = jnp.concatenate([p.reshape(-1) for p in odd_params])
    np.testing.assert_allclose(np.asarray(flat_odd), np.asarray(ref_odd), rtol=0, atol=0)

    print("KERNEL_OK")
</pallas_src>

<mosaic_0001>
module attributes {stable_mosaic.version = 11 : i64} {
  func.func @kernel(%arg0: memref<8x128xf32, #tpu.memory_space<any>>, %arg1: memref<1x128xf32, #tpu.memory_space<any>>, %arg2: memref<2x128xf32, #tpu.memory_space<any>>, %arg3: memref<2x128xf32, #tpu.memory_space<any>>, %arg4: memref<13x128xf32, #tpu.memory_space<any>>, %arg5: memref<4x!tpu.dma_semaphore, #tpu.memory_space<semaphore_mem>>) attributes {dimension_semantics = [], scalar_prefetch = 0 : i64, scratch_operands = 1 : i64, tpu.core_type = #tpu.core_type<tc>} {
    %c0_i32 = arith.constant 0 : i32
    %c0_i32_0 = arith.constant 0 : i32
    %c0_i32_1 = arith.constant 0 : i32
    %0 = tpu.memref_slice %arg4[%c0_i32_0, %c0_i32_1] : memref<13x128xf32, #tpu.memory_space<any>> -> memref<8x128xf32, #tpu.memory_space<any>>
    %1 = tpu.memref_slice %arg5[%c0_i32] : memref<4x!tpu.dma_semaphore, #tpu.memory_space<semaphore_mem>> -> memref<1x!tpu.dma_semaphore, #tpu.memory_space<semaphore_mem>>
    %2 = tpu.memref_squeeze %1 : memref<1x!tpu.dma_semaphore, #tpu.memory_space<semaphore_mem>> -> memref<!tpu.dma_semaphore, #tpu.memory_space<semaphore_mem>>
    tpu.enqueue_dma source(%arg0 : memref<8x128xf32, #tpu.memory_space<any>>) target(%0 : memref<8x128xf32, #tpu.memory_space<any>>) target_semaphore(%2 : memref<!tpu.dma_semaphore, #tpu.memory_space<semaphore_mem>>)
    %c1_i32 = arith.constant 1 : i32
    %c8_i32 = arith.constant 8 : i32
    %c0_i32_2 = arith.constant 0 : i32
    %3 = tpu.memref_slice %arg4[%c8_i32, %c0_i32_2] : memref<13x128xf32, #tpu.memory_space<any>> -> memref<1x128xf32, #tpu.memory_space<any>>
    %4 = tpu.memref_slice %arg5[%c1_i32] : memref<4x!tpu.dma_semaphore, #tpu.memory_space<semaphore_mem>> -> memref<1x!tpu.dma_semaphore, #tpu.memory_space<semaphore_mem>>
    %5 = tpu.memref_squeeze %4 : memref<1x!tpu.dma_semaphore, #tpu.memory_space<semaphore_mem>> -> memref<!tpu.dma_semaphore, #tpu.memory_space<semaphore_mem>>
    tpu.enqueue_dma source(%arg1 : memref<1x128xf32, #tpu.memory_space<any>>) target(%3 : memref<1x128xf32, #tpu.memory_space<any>>) target_semaphore(%5 : memref<!tpu.dma_semaphore, #tpu.memory_space<semaphore_mem>>)
    %c2_i32 = arith.constant 2 : i32
    %c9_i32 = arith.constant 9 : i32
    %c0_i32_3 = arith.constant 0 : i32
    %6 = tpu.memref_slice %arg4[%c9_i32, %c0_i32_3] : memref<13x128xf32, #tpu.memory_space<any>> -> memref<2x128xf32, #tpu.memory_space<any>>
    %7 = tpu.memref_slice %arg5[%c2_i32] : memref<4x!tpu.dma_semaphore, #tpu.memory_space<semaphore_mem>> -> memref<1x!tpu.dma_semaphore, #tpu.memory_space<semaphore_mem>>
    %8 = tpu.memref_squeeze %7 : memref<1x!tpu.dma_semaphore, #tpu.memory_space<semaphore_mem>> -> memref<!tpu.dma_semaphore, #tpu.memory_space<semaphore_mem>>
    tpu.enqueue_dma source(%arg2 : memref<2x128xf32, #tpu.memory_space<any>>) target(%6 : memref<2x128xf32, #tpu.memory_space<any>>) target_semaphore(%8 : memref<!tpu.dma_semaphore, #tpu.memory_space<semaphore_mem>>)
    %c3_i32 = arith.constant 3 : i32
    %c11_i32 = arith.constant 11 : i32
    %c0_i32_4 = arith.constant 0 : i32
    %9 = tpu.memref_slice %arg4[%c11_i32, %c0_i32_4] : memref<13x128xf32, #tpu.memory_space<any>> -> memref<2x128xf32, #tpu.memory_space<any>>
    %10 = tpu.memref_slice %arg5[%c3_i32] : memref<4x!tpu.dma_semaphore, #tpu.memory_space<semaphore_mem>> -> memref<1x!tpu.dma_semaphore, #tpu.memory_space<semaphore_mem>>
    %11 = tpu.memref_squeeze %10 : memref<1x!tpu.dma_semaphore, #tpu.memory_space<semaphore_mem>> -> memref<!tpu.dma_semaphore, #tpu.memory_space<semaphore_mem>>
    tpu.enqueue_dma source(%arg3 : memref<2x128xf32, #tpu.memory_space<any>>) target(%9 : memref<2x128xf32, #tpu.memory_space<any>>) target_semaphore(%11 : memref<!tpu.dma_semaphore, #tpu.memory_space<semaphore_mem>>)
    %c0_i32_5 = arith.constant 0 : i32
    %c0_i32_6 = arith.constant 0 : i32
    %c0_i32_7 = arith.constant 0 : i32
    %12 = tpu.memref_slice %arg4[%c0_i32_6, %c0_i32_7] : memref<13x128xf32, #tpu.memory_space<any>> -> memref<8x128xf32, #tpu.memory_space<any>>
    %13 = tpu.memref_slice %arg5[%c0_i32_5] : memref<4x!tpu.dma_semaphore, #tpu.memory_space<semaphore_mem>> -> memref<1x!tpu.dma_semaphore, #tpu.memory_space<semaphore_mem>>
    %14 = tpu.memref_squeeze %13 : memref<1x!tpu.dma_semaphore, #tpu.memory_space<semaphore_mem>> -> memref<!tpu.dma_semaphore, #tpu.memory_space<semaphore_mem>>
    tpu.wait_dma2 semaphore(%14 : memref<!tpu.dma_semaphore, #tpu.memory_space<semaphore_mem>>) src(%arg0 : memref<8x128xf32, #tpu.memory_space<any>>) dst(%12 : memref<8x128xf32, #tpu.memory_space<any>>)
    %c1_i32_8 = arith.constant 1 : i32
    %c8_i32_9 = arith.constant 8 : i32
    %c0_i32_10 = arith.constant 0 : i32
    %15 = tpu.memref_slice %arg4[%c8_i32_9, %c0_i32_10] : memref<13x128xf32, #tpu.memory_space<any>> -> memref<1x128xf32, #tpu.memory_space<any>>
    %16 = tpu.memref_slice %arg5[%c1_i32_8] : memref<4x!tpu.dma_semaphore, #tpu.memory_space<semaphore_mem>> -> memref<1x!tpu.dma_semaphore, #tpu.memory_space<semaphore_mem>>
    %17 = tpu.memref_squeeze %16 : memref<1x!tpu.dma_semaphore, #tpu.memory_space<semaphore_mem>> -> memref<!tpu.dma_semaphore, #tpu.memory_space<semaphore_mem>>
    tpu.wait_dma2 semaphore(%17 : memref<!tpu.dma_semaphore, #tpu.memory_space<semaphore_mem>>) src(%arg1 : memref<1x128xf32, #tpu.memory_space<any>>) dst(%15 : memref<1x128xf32, #tpu.memory_space<any>>)
    %c2_i32_11 = arith.constant 2 : i32
    %c9_i32_12 = arith.constant 9 : i32
    %c0_i32_13 = arith.constant 0 : i32
    %18 = tpu.memref_slice %arg4[%c9_i32_12, %c0_i32_13] : memref<13x128xf32, #tpu.memory_space<any>> -> memref<2x128xf32, #tpu.memory_space<any>>
    %19 = tpu.memref_slice %arg5[%c2_i32_11] : memref<4x!tpu.dma_semaphore, #tpu.memory_space<semaphore_mem>> -> memref<1x!tpu.dma_semaphore, #tpu.memory_space<semaphore_mem>>
    %20 = tpu.memref_squeeze %19 : memref<1x!tpu.dma_semaphore, #tpu.memory_space<semaphore_mem>> -> memref<!tpu.dma_semaphore, #tpu.memory_space<semaphore_mem>>
    tpu.wait_dma2 semaphore(%20 : memref<!tpu.dma_semaphore, #tpu.memory_space<semaphore_mem>>) src(%arg2 : memref<2x128xf32, #tpu.memory_space<any>>) dst(%18 : memref<2x128xf32, #tpu.memory_space<any>>)
    %c3_i32_14 = arith.constant 3 : i32
    %c11_i32_15 = arith.constant 11 : i32
    %c0_i32_16 = arith.constant 0 : i32
    %21 = tpu.memref_slice %arg4[%c11_i32_15, %c0_i32_16] : memref<13x128xf32, #tpu.memory_space<any>> -> memref<2x128xf32, #tpu.memory_space<any>>
    %22 = tpu.memref_slice %arg5[%c3_i32_14] : memref<4x!tpu.dma_semaphore, #tpu.memory_space<semaphore_mem>> -> memref<1x!tpu.dma_semaphore, #tpu.memory_space<semaphore_mem>>
    %23 = tpu.memref_squeeze %22 : memref<1x!tpu.dma_semaphore, #tpu.memory_space<semaphore_mem>> -> memref<!tpu.dma_semaphore, #tpu.memory_space<semaphore_mem>>
    tpu.wait_dma2 semaphore(%23 : memref<!tpu.dma_semaphore, #tpu.memory_space<semaphore_mem>>) src(%arg3 : memref<2x128xf32, #tpu.memory_space<any>>) dst(%21 : memref<2x128xf32, #tpu.memory_space<any>>)
    return
  }
}

</mosaic_0001>

<llo_original>
// kernel: tpu_custom_call.1
$region0: #{tpu_custom_call.1}
  #allocation0 [shape = 'u32[]', space=smem, size = 0x4, offset = 0x4, fixed_abs, tag = 'smem constant byte address 0x4 - core index']
  #allocation1 [shape = 'u32[144,128]{1,0:T(1,128)}', space=vmem, size = 0x12000, scoped, tag = 'internal scratch']
  #allocation2 [shape = 's32[4]{0}', space=sflag, size = 0x10, scoped, tag = 'scratch operand']
  #allocation3 [shape = 's32[]', space=sflag, size = 0x4, offset = 0, fixed_abs, tag = 'sflag constant byte address 0x0 - dummy sync flag']
  #allocation4 [shape = 'u32[0]{0}', space=smem, size = 0, offset = 0, fixed_abs, tag = 'smem constant byte address 0x0 - null']
  #allocation5 [shape = 's32[]', space=sflag, size = 0x4, offset = 0, fixed_abs, tag = 'sflag constant byte address 0x0 - dummy sync flag']
  #allocation6 [shape = 's32[]', space=sflag, size = 0x4, offset = 0, fixed_abs, tag = 'sflag constant byte address 0x0 - dummy sync flag']
  #allocation7 [shape = 'u32[]', space=smem, size = 0x4, offset = 0x44, fixed_abs, tag = 'smem constant byte address 0x44 - assertion arg 0']
  #allocation8 [shape = 'u32[]', space=smem, size = 0x4, offset = 0x48, fixed_abs, tag = 'smem constant byte address 0x48 - assertion arg 1']
  #allocation9 [shape = 's32[]', space=sflag, size = 0x4, offset = 0, fixed_abs, tag = 'sflag constant byte address 0x0 - dummy sync flag']
  #allocation10 [shape = 's32[]', space=sflag, size = 0x4, offset = 0, fixed_abs, tag = 'sflag constant byte address 0x0 - dummy sync flag']
  #allocation11 [shape = 's32[]', space=sflag, size = 0x4, offset = 0, fixed_abs, tag = 'sflag constant byte address 0x0 - dummy sync flag']
  #allocation12 [shape = 's32[]', space=sflag, size = 0x4, offset = 0, fixed_abs, tag = 'sflag constant byte address 0x0 - dummy sync flag']
  %s0 = inlined_call_operand.hbm [shape: f32[8,128], index: 0, kind: input, shape index: {}]
  %s1 = inlined_call_operand.vmem [shape: f32[1,128], index: 1, kind: input, shape index: {}]
  %s2 = inlined_call_operand.vmem [shape: f32[2,128], index: 2, kind: input, shape index: {}]
  %s3 = inlined_call_operand.vmem [shape: f32[2,128], index: 3, kind: input, shape index: {}]
  %s4 = inlined_call_operand.hbm [shape: f32[13,128], index: 4, kind: output, shape index: {}]
  %s5 = sld [smem:[#allocation0]]
  $region14: #{tpu_custom_call.1} parent=0
    _
  %s7 = ssub.s32 1, %s5
  %s8 = scalar_select 0, %s7, %s5
  %s10 = sshll.u32 1, 14
  %s11 = sxor.u32 4294967295, %s10
  %s14 = sshll.u32 3, 24
  %s15 = sxor.u32 4294967295, %s14
  %s16 = sand.u32 0, %s15
  %s18 = sor.u32 %s16, 0
  %21 = dma.general %s0, 128, %s4, [#allocation2], [#allocation3], [#allocation4], %s18, 0
  %s22 = scalar_lea.hbm %s4, 128
  %s23 = scalar_lea.sflag [#allocation2], 1
  // Predicated region
  $region2: #{tpu_custom_call.1} parent=0 // pred_check
    _
  $region3: #{tpu_custom_call.1} parent=0 // pred_check_branch
    %25 = sbr.rel target = $region5
  $region4: #{tpu_custom_call.1} parent=0 // pred_region
    %26 = sst [smem:[#allocation7]] [#allocation6]
    %27 = sst [smem:[#allocation8]] [#allocation5]
  $region5: #{tpu_custom_call.1} parent=0 // pred_fallthru
    _
  %29 = shalt.err (0)
  %s31 = sshll.u32 %s1, 4
  %s32 = int_to_ptr.vmem [resolvable:$true] %s31
  %34 = dma.vmem_to_hbm [thread:$0]  %s32, 16, %s22, %s23
  %s35 = scalar_lea.hbm %s4, 144
  %s36 = scalar_lea.sflag [#allocation2], 2
  // Predicated region
  $region6: #{tpu_custom_call.1} parent=0 // pred_check
    _
  $region7: #{tpu_custom_call.1} parent=0 // pred_check_branch
    %38 = sbr.rel target = $region9
  $region8: #{tpu_custom_call.1} parent=0 // pred_region
    %39 = sst [smem:[#allocation7]] [#allocation10]
    %40 = sst [smem:[#allocation8]] [#allocation9]
  $region9: #{tpu_custom_call.1} parent=0 // pred_fallthru
    _
  %42 = shalt.err (0)
  %s44 = sshll.u32 %s2, 4
  %s45 = int_to_ptr.vmem [resolvable:$true] %s44
  %47 = dma.vmem_to_hbm [thread:$0]  %s45, 32, %s35, %s36
  %s48 = scalar_lea.hbm %s4, 176
  %s49 = scalar_lea.sflag [#allocation2], 3
  // Predicated region
  $region10: #{tpu_custom_call.1} parent=0 // pred_check
    _
  $region11: #{tpu_custom_call.1} parent=0 // pred_check_branch
    %51 = sbr.rel target = $region13
  $region12: #{tpu_custom_call.1} parent=0 // pred_region
    %52 = sst [smem:[#allocation7]] [#allocation12]
    %53 = sst [smem:[#allocation8]] [#allocation11]
  $region13: #{tpu_custom_call.1} parent=0 // pred_fallthru
    _
  %55 = shalt.err (0)
  %s57 = sshll.u32 %s3, 4
  %s58 = int_to_ptr.vmem [resolvable:$true] %s57
  %60 = dma.vmem_to_hbm [thread:$0]  %s58, 32, %s48, %s49
  %s61 = smul.u32 8, 1
  %s62 = sshll.u32 %s61, 4
  %63 = dma.done [#allocation2], %s62
  %s64 = smul.u32 1, 1
  %s65 = sshll.u32 %s64, 4
  %66 = dma.done %s23, %s65
  %s67 = smul.u32 2, 1
  %s68 = sshll.u32 %s67, 4
  %69 = dma.done %s36, %s68
  %s70 = sshll.u32 %s67, 4
  %71 = dma.done %s49, %s70
  %72 = vsyncmov [#allocation2]
  %s73 = vpop.sfrf %72
  %p74 = scmp.eq.s32.totalorder %s73, 0
  %p75 = pneg %p74
  %77 = shalt.err (%p75)
  %s78 = scalar_lea.sflag [#allocation2], 1
  %79 = vsyncmov %s78
  %s80 = vpop.sfrf %79
  %p81 = scmp.eq.s32.totalorder %s80, 0
  %p82 = pneg %p81
  %84 = shalt.err (%p82)
  %s85 = scalar_lea.sflag [#allocation2], 2
  %86 = vsyncmov %s85
  %s87 = vpop.sfrf %86
  %p88 = scmp.eq.s32.totalorder %s87, 0
  %p89 = pneg %p88
  %91 = shalt.err (%p89)
  %s92 = scalar_lea.sflag [#allocation2], 3
  %93 = vsyncmov %s92
  %s94 = vpop.sfrf %93
  %p95 = scmp.eq.s32.totalorder %s94, 0
  %p96 = pneg %p95
  %98 = shalt.err (%p96)

</llo_original>
